<compile_context>
chip_gen: v5e
topology: v5e:2x2
jax: 0.10.0
libtpu: 0.0.40
codegen_flags: <defaults>
</compile_context>

<pallas_src>
import math
from functools import partial

import jax
import jax.numpy as jnp
from jax import lax
from jax.experimental import pallas as pl
from jax.experimental.pallas import tpu as pltpu


def _hint_multiple(x, m):
    """Alignment hint that is a no-op for static Python ints."""
    return x if isinstance(x, int) else pl.multiple_of(x, m)


def _mse_partial_kernel(pred_ref, ref_ref, part_ref, acc_ref, *,
                        cps, tk, tk_acc, n_sub, n_valid, needs_mask):
    """Streams (T, R, tk) chunks and accumulates per-task sum((pred - ref)^2).

    Grid = (split, chunk): `split` (parallel) shards the feature sweep across
    TensorCores on megacore parts; `chunk` (arbitrary) is the reduction axis.
    part_ref: (1, T, 1) partial sums for this split.  acc_ref: (T, R, tk_acc)
    f32 scratch, carried through the chunk sweep.
    """
    s = pl.program_id(0)
    k = pl.program_id(1)
    chunk = s * cps + k          # intended global chunk index (may be phantom)

    @pl.when(k == 0)
    def _():
        acc_ref[...] = jnp.zeros_like(acc_ref)

    def accumulate(acc, masked):
        col0 = chunk * tk

        def body(j, a):
            start = _hint_multiple(j * tk_acc, tk_acc)
            p = pred_ref[:, :, pl.ds(start, tk_acc)].astype(jnp.float32)
            r = ref_ref[:, :, pl.ds(start, tk_acc)].astype(jnp.float32)
            d = p - r
            sq = d * d
            if masked:
                lane = lax.broadcasted_iota(jnp.int32, (1, 1, tk_acc), 2)
                sq = jnp.where(col0 + start + lane < n_valid, sq, 0.0)
            return a + sq

        if n_sub == 1:
            return body(0, acc)
        return lax.fori_loop(0, n_sub, body, acc, unroll=min(n_sub, 8))

    acc0 = acc_ref[...]
    if needs_mask:
        # Only partial/phantom chunks pay for the iota + where; the steady
        # state runs the unmasked branch.
        is_tail = (chunk + 1) * tk > n_valid

        @pl.when(is_tail)
        def _():
            acc_ref[...] = accumulate(acc0, True)

        @pl.when(jnp.logical_not(is_tail))
        def _():
            acc_ref[...] = accumulate(acc0, False)
    else:
        acc_ref[...] = accumulate(acc0, False)

    @pl.when(k == cps - 1)
    def _():
        lane_sums = jnp.sum(acc_ref[...], axis=2)                # (T, R)
        task_sums = jnp.sum(lane_sums, axis=1, keepdims=True)    # (T, 1)
        part_ref[0] = task_sums


def _tchebycheff_kernel(part_ref, w_ref, ml_ref, loss_ref, tl_ref, *,
                        inv_n_elem, mu):
    """Smooth-Tchebycheff scalarization of the per-task MSEs (== forward)."""
    task_sums = jnp.sum(part_ref[...], axis=0)          # (T, 1)
    losses = task_sums * inv_n_elem                      # per-task MSE
    u = w_ref[...] * (losses - ml_ref[...])              # (T, 1)
    u_max = jnp.max(u, axis=0, keepdims=True)            # (1, 1)
    v = (u - u_max) * (1.0 / mu)
    s = jnp.sum(jnp.exp(v), axis=0, keepdims=True)       # (1, 1)
    loss_ref[...] = u_max + mu * jnp.log(s)
    tl_ref[...] = losses


def smooth_tchebycheff_loss(predictions, reference, weights=None,
                            min_loss=0.0, mu=0.2, *, tk_max=None):
    """predictions/reference: (n_tasks, ...).  weights/min_loss: (n_tasks,) or scalar.

    Returns (scalar smooth-Tchebycheff loss, per-task MSE losses (n_tasks,))."""
    assert reference.shape == predictions.shape
    T = predictions.shape[0]
    f = int(math.prod(predictions.shape[1:]))

    if weights is None:
        weights = jnp.full((T,), 1.0 / T, jnp.float32)
    else:
        weights = jnp.asarray(weights, jnp.float32).reshape(T)
    if isinstance(min_loss, (int, float)):
        min_loss = jnp.full((T,), float(min_loss), jnp.float32)
    else:
        min_loss = jnp.asarray(min_loss, jnp.float32).reshape(T)
    w2 = weights.reshape(T, 1)
    ml2 = min_loss.reshape(T, 1)

    in_itemsize = jnp.dtype(predictions.dtype).itemsize

    # ---- layout: (T, f) -> (T, R, f_r), dtype-aware sublane packing ---------
    R_full = max(8, 32 // in_itemsize)        # 8 f32, 16 bf16/f16, 32 int8/fp8
    R = 1
    r = R_full
    while r > 1:
        if f % r == 0:
            R = r
            break
        r //= 2

    flat_pred = predictions.reshape(T, f)
    flat_ref = reference.reshape(T, f)
    f_work = f
    if R < 8:
        # Badly packed (1-2 of 8 sublanes): zero-pad the feature axis once so
        # the bulk streams fully packed.  Zeros in both arrays add 0 to the sum;
        # the MSE still divides by the true element count f.
        f_work = ((f + R_full - 1) // R_full) * R_full
        pad = f_work - f
        flat_pred = jnp.pad(flat_pred, ((0, 0), (0, pad)))
        flat_ref = jnp.pad(flat_ref, ((0, 0), (0, pad)))
        R = R_full
    f_r = f_work // R
    pred3 = flat_pred.reshape(T, R, f_r)
    ref3 = flat_ref.reshape(T, R, f_r)

    # ---- generation-aware tile sizing ---------------------------------------
    try:
        vmem_cap = int(getattr(pltpu.get_tpu_info(), "vmem_capacity_bytes", 0))
    except Exception:
        vmem_cap = 0
    if vmem_cap <= 0:
        vmem_cap = 64 << 20                   # conservative fallback (v7x)
    pipe_budget = min(int(vmem_cap * 0.4), 48 << 20)   # 2 inputs x 2 buffers

    # vreg-resident accumulator width (<= ~8 f32 vregs).
    tk_acc = (32 * 1024) // (T * R * 4)
    tk_acc = max(128, min(1024, (tk_acc // 128) * 128))
    if tk_max is not None and int(tk_max) < tk_acc:
        tk_acc = max(128, (int(tk_max) // 128) * 128)

    per_lane = 4 * T * R * in_itemsize        # bytes per feature column in flight
    tk_hi = max(tk_acc, (pipe_budget // per_lane) // tk_acc * tk_acc)
    if tk_max is not None:
        tk_hi = min(tk_hi, max(tk_acc, (int(tk_max) // tk_acc) * tk_acc))

    if f_r < tk_acc:
        tk_acc = f_r                          # tiny feature axis: one whole block
        tk = f_r
    else:
        tk = min(tk_hi, (f_r // tk_acc) * tk_acc)   # multiple of tk_acc
    n_sub = tk // tk_acc
    n_chunks = -(-f_r // tk)

    # Split the chunk sweep in two so megacore parts run one half per core.
    if n_chunks >= 2:
        n_split = 2
        cps = -(-n_chunks // 2)
        n_chunks_total = 2 * cps
    else:
        n_split, cps, n_chunks_total = 1, n_chunks, n_chunks
    needs_mask = (n_chunks_total * tk != f_r)

    if n_chunks_total == n_chunks:
        in_idx = lambda s, k: (0, 0, s * cps + k)
    else:
        # Odd chunk count: the phantom last chunk re-reads the final real block
        # (clamped index) and is fully masked to zero inside the kernel.
        in_idx = lambda s, k: (0, 0, jnp.minimum(s * cps + k, n_chunks - 1))

    needed = (4 * T * R * tk * in_itemsize    # 2 inputs x 2 pipeline buffers
              + T * R * tk_acc * 4            # accumulator scratch
              + (1 << 20))                    # pads, partial out, semaphores
    vmem_limit = int(min(max(needed + (4 << 20), 16 << 20),
                         int(0.75 * vmem_cap)))

    mse_kernel = partial(_mse_partial_kernel, cps=cps, tk=tk, tk_acc=tk_acc,
                         n_sub=n_sub, n_valid=f_r, needs_mask=needs_mask)

    cost = pl.CostEstimate(
        flops=int(3 * T * R * f_r),
        transcendentals=0,
        bytes_accessed=int(2 * T * R * f_r * in_itemsize + n_split * T * 4),
    )

    partials = pl.pallas_call(
        mse_kernel,
        out_shape=jax.ShapeDtypeStruct((n_split, T, 1), jnp.float32),
        grid_spec=pltpu.PrefetchScalarGridSpec(
            num_scalar_prefetch=0,
            grid=(n_split, cps),
            in_specs=[
                pl.BlockSpec((T, R, tk), in_idx),    # predictions chunk
                pl.BlockSpec((T, R, tk), in_idx),    # reference chunk
            ],
            out_specs=pl.BlockSpec((1, T, 1), lambda s, k: (s, 0, 0)),
            scratch_shapes=[pltpu.VMEM((T, R, tk_acc), jnp.float32)],
        ),
        compiler_params=pltpu.CompilerParams(
            dimension_semantics=("parallel", "arbitrary"),
            vmem_limit_bytes=vmem_limit),
        cost_estimate=cost,
    )(pred3, ref3)

    # Tiny single-step kernel: combine per-split partials and scalarize.
    loss, task_losses = pl.pallas_call(
        partial(_tchebycheff_kernel, inv_n_elem=1.0 / float(f), mu=float(mu)),
        out_shape=(jax.ShapeDtypeStruct((1, 1), jnp.float32),
                   jax.ShapeDtypeStruct((T, 1), jnp.float32)),
    )(partials, w2, ml2)

    return loss[0, 0], task_losses[:, 0]


def _smooth_tchebycheff_ref(predictions, reference, weights, min_loss, mu):
    """Pure-JAX reference (mirrors the PyTorch forward with per-task MSE)."""
    losses = jnp.mean(
        (predictions.astype(jnp.float32) - reference.astype(jnp.float32)) ** 2,
        axis=tuple(range(1, predictions.ndim)))
    u = weights * (losses - min_loss)
    u_max = jnp.max(u)
    v = u - u_max
    loss = u_max + mu * jnp.log(jnp.sum(jnp.exp(v / mu)))
    return loss, losses


if __name__ == "__main__":
    mu = 0.2

    def check(pred, ref_arr, tk_max=None, rtol=1e-5, atol=1e-5):
        T = pred.shape[0]
        weights = jnp.full((T,), 1.0 / T, jnp.float32)
        min_loss = jnp.zeros((T,), jnp.float32)
        loss, task_losses = smooth_tchebycheff_loss(
            pred, ref_arr, weights, min_loss, mu, tk_max=tk_max)
        loss = jax.block_until_ready(loss)
        task_losses = jax.block_until_ready(task_losses)
        loss_ref, tl_ref = _smooth_tchebycheff_ref(
            pred, ref_arr, weights, min_loss, mu)
        assert jnp.allclose(loss, loss_ref, rtol=rtol, atol=atol), (loss, loss_ref)
        assert jnp.allclose(task_losses, tl_ref, rtol=rtol, atol=atol), (
            task_losses, tl_ref)

    key = jax.random.PRNGKey(0)

    # Case 1: canonical TrajCast shape -- 2 tasks (displacements, velocities),
    # 8 atoms x 3 components.  Single chunk, single sub-chunk, R=8.
    k1, k2, key = jax.random.split(key, 3)
    check(jax.random.normal(k1, (2, 8, 3), jnp.float32),
          jax.random.normal(k2, (2, 8, 3), jnp.float32))

    # Case 2: feature count not divisible by 8 (padded once to full packing)
    # plus a tiny tile cap: several chunks, dual split, a phantom chunk and a
    # masked tail chunk are all exercised.
    k1, k2, key = jax.random.split(key, 3)
    check(jax.random.normal(k1, (2, 700, 3), jnp.float32),
          jax.random.normal(k2, (2, 700, 3), jnp.float32), tk_max=128)

    # Case 3: bf16 inputs streamed as-is (R=16 packing), cast to f32 in-kernel.
    k1, k2, key = jax.random.split(key, 3)
    check(jax.random.normal(k1, (2, 64, 3), jnp.float32).astype(jnp.bfloat16),
          jax.random.normal(k2, (2, 64, 3), jnp.float32).astype(jnp.bfloat16))

    # Case 4: single chunk with a multi-sub-chunk vreg-resident accumulator.
    k1, k2, key = jax.random.split(key, 3)
    check(jax.random.normal(k1, (2, 4096, 3), jnp.float32),
          jax.random.normal(k2, (2, 4096, 3), jnp.float32))

    # Case 5: odd feature count (padded), two chunks, one per split, masked tail.
    k1, k2, key = jax.random.split(key, 3)
    check(jax.random.normal(k1, (2, 2731, 3), jnp.float32),
          jax.random.normal(k2, (2, 2731, 3), jnp.float32))

    print("KERNEL_OK")
</pallas_src>

<mosaic_0001>
module attributes {stable_mosaic.version = 11 : i64} {
  func.func @_mse_partial_kernel(%arg0: i32, %arg1: i32, %arg2: memref<2x8x3xf32, #tpu.memory_space<vmem>>, %arg3: memref<2x8x3xf32, #tpu.memory_space<vmem>>, %arg4: memref<1x2x1xf32, #tpu.memory_space<vmem>>, %arg5: memref<2x8x3xf32, #tpu.memory_space<vmem>>) attributes {dimension_semantics = [#tpu.dimension_semantics<parallel>, #tpu.dimension_semantics<arbitrary>], iteration_bounds = array<i64: 1, 1>, scalar_prefetch = 0 : i64, scratch_operands = 1 : i64, tpu.core_type = #tpu.core_type<tc>, window_params = [{transform_indices = @transform_0, window_bounds = array<i64: 2, 8, 3>}, {transform_indices = @transform_1, window_bounds = array<i64: 2, 8, 3>}, {transform_indices = @transform_2, window_bounds = array<i64: 1, 2, 1>}]} {
    %c0_i32 = arith.constant 0 : i32
    %0 = arith.cmpi eq, %arg1, %c0_i32 : i32
    %1 = arith.extui %0 : i1 to i32
    %c0_i32_0 = arith.constant 0 : i32
    %2 = arith.cmpi ne, %1, %c0_i32_0 : i32
    scf.if %2 {
      %cst = arith.constant 0.000000e+00 : f32
      %13 = vector.broadcast %cst : f32 to vector<2x8x3xf32>
      %c0_14 = arith.constant 0 : index
      %c0_15 = arith.constant 0 : index
      %c0_16 = arith.constant 0 : index
      %14 = vector.load %arg5[%c0_14, %c0_15, %c0_16] : memref<2x8x3xf32, #tpu.memory_space<vmem>>, vector<2x8x3xf32>
      tpu.vector_store %arg5[%c0_14, %c0_15, %c0_16], %13 {strides = array<i32>} : memref<2x8x3xf32, #tpu.memory_space<vmem>>, vector<2x8x3xf32>,
    } else {
    }
    %c0 = arith.constant 0 : index
    %c0_1 = arith.constant 0 : index
    %c0_2 = arith.constant 0 : index
    %3 = vector.load %arg5[%c0, %c0_1, %c0_2] : memref<2x8x3xf32, #tpu.memory_space<vmem>>, vector<2x8x3xf32>
    %c0_3 = arith.constant 0 : index
    %c0_4 = arith.constant 0 : index
    %c0_5 = arith.constant 0 : index
    %4 = vector.load %arg2[%c0_3, %c0_4, %c0_5] : memref<2x8x3xf32, #tpu.memory_space<vmem>>, vector<2x8x3xf32>
    %c0_6 = arith.constant 0 : index
    %c0_7 = arith.constant 0 : index
    %c0_8 = arith.constant 0 : index
    %5 = vector.load %arg3[%c0_6, %c0_7, %c0_8] : memref<2x8x3xf32, #tpu.memory_space<vmem>>, vector<2x8x3xf32>
    %6 = arith.subf %4, %5 : vector<2x8x3xf32>
    %7 = arith.mulf %6, %6 : vector<2x8x3xf32>
    %8 = arith.addf %3, %7 : vector<2x8x3xf32>
    %c0_9 = arith.constant 0 : index
    %c0_10 = arith.constant 0 : index
    %c0_11 = arith.constant 0 : index
    %9 = vector.load %arg5[%c0_9, %c0_10, %c0_11] : memref<2x8x3xf32, #tpu.memory_space<vmem>>, vector<2x8x3xf32>
    tpu.vector_store %arg5[%c0_9, %c0_10, %c0_11], %8 {strides = array<i32>} : memref<2x8x3xf32, #tpu.memory_space<vmem>>, vector<2x8x3xf32>,
    %c0_i32_12 = arith.constant 0 : i32
    %10 = arith.cmpi eq, %arg1, %c0_i32_12 : i32
    %11 = arith.extui %10 : i1 to i32
    %c0_i32_13 = arith.constant 0 : i32
    %12 = arith.cmpi ne, %11, %c0_i32_13 : i32
    scf.if %12 {
      %c0_14 = arith.constant 0 : index
      %c0_15 = arith.constant 0 : index
      %c0_16 = arith.constant 0 : index
      %13 = vector.load %arg5[%c0_14, %c0_15, %c0_16] : memref<2x8x3xf32, #tpu.memory_space<vmem>>, vector<2x8x3xf32>
      %cst = arith.constant dense<0.000000e+00> : vector<2x8xf32>
      %14 = vector.multi_reduction <add>, %13, %cst [2] : vector<2x8x3xf32> to vector<2x8xf32>
      %cst_17 = arith.constant dense<0.000000e+00> : vector<2xf32>
      %15 = vector.multi_reduction <add>, %14, %cst_17 [1] : vector<2x8xf32> to vector<2xf32>
      %16 = vector.shape_cast %15 : vector<2xf32> to vector<2x1xf32>
      %c0_18 = arith.constant 0 : index
      %c0_19 = arith.constant 0 : index
      %c0_20 = arith.constant 0 : index
      %17 = vector.load %arg4[%c0_18, %c0_19, %c0_20] : memref<1x2x1xf32, #tpu.memory_space<vmem>>, vector<1x2x1xf32>
      %18 = vector.shape_cast %17 : vector<1x2x1xf32> to vector<2x1xf32>
      %19 = vector.shape_cast %16 : vector<2x1xf32> to vector<1x2x1xf32>
      tpu.vector_store %arg4[%c0_18, %c0_19, %c0_20], %19 {strides = array<i32>} : memref<1x2x1xf32, #tpu.memory_space<vmem>>, vector<1x2x1xf32>,
    } else {
    }
    return
  }
  func.func @transform_0(%arg0: i32, %arg1: i32) -> (i32, i32, i32) {
    %c1_i32 = arith.constant 1 : i32
    %0 = arith.muli %arg0, %c1_i32 : i32
    %1 = arith.addi %0, %arg1 : i32
    %c0_i32 = arith.constant 0 : i32
    %c0_i32_0 = arith.constant 0 : i32
    %c0_i32_1 = arith.constant 0 : i32
    return %c0_i32, %c0_i32_0, %1 : i32, i32, i32
  }
  func.func @transform_1(%arg0: i32, %arg1: i32) -> (i32, i32, i32) {
    %c1_i32 = arith.constant 1 : i32
    %0 = arith.muli %arg0, %c1_i32 : i32
    %1 = arith.addi %0, %arg1 : i32
    %c0_i32 = arith.constant 0 : i32
    %c0_i32_0 = arith.constant 0 : i32
    %c0_i32_1 = arith.constant 0 : i32
    return %c0_i32, %c0_i32_0, %1 : i32, i32, i32
  }
  func.func @transform_2(%arg0: i32, %arg1: i32) -> (i32, i32, i32) {
    %c0_i32 = arith.constant 0 : i32
    %c0_i32_0 = arith.constant 0 : i32
    %c0_i32_1 = arith.constant 0 : i32
    return %arg0, %c0_i32, %c0_i32_0 : i32, i32, i32
  }
}

</mosaic_0001>

<llo_original>
// kernel: tpu_custom_call.1
$region0: #{tpu_custom_call.1}
  #allocation0 [shape = 'u32[]', space=smem, size = 0x4, offset = 0x4, fixed_abs, tag = 'smem constant byte address 0x4 - core index']
  #allocation1 [shape = 'u32[72,128]{1,0:T(1,128)}', space=vmem, size = 0x9000, scoped, tag = 'internal scratch']
  #allocation2 [shape = 'f32[2,8,3]{2,1,0:T(8,128)}', space=vmem, size = 0x2000, scoped, tag = 'scratch operand']
  %s0 = inlined_call_operand.vmem [shape: f32[2,8,3], index: 0, kind: input, shape index: {}]
  %s1 = inlined_call_operand.vmem [shape: f32[2,8,3], index: 1, kind: input, shape index: {}]
  %s2 = inlined_call_operand.vmem [shape: f32[1,2,1], index: 2, kind: output, shape index: {}]
  %s3 = sld [smem:[#allocation0]]
  $region26: #{tpu_custom_call.1} parent=0
    _
  %s5 = ssub.s32 1, %s3
  %s6 = scalar_select 0, %s5, %s3
  // Predicated region
  $region2: #{tpu_custom_call.1} parent=0 // pred_check
    _
  $region3: #{tpu_custom_call.1} parent=0 // pred_check_branch
    %8 = sbr.rel (0) target = $region5
  $region4: #{tpu_custom_call.1} parent=0 // pred_region
    %s9 = sadd.s32 0, 0
    %p10 = scmp.lt.s32.totalorder %s9, 0
    %s11 = scalar_select %p10, %s9, 0
    %s12 = smul.addr %s11, 8
    %s13 = scalar_lea.vmem %s0, %s12
    %s14 = sadd.s32 0, 0
  $region5: #{tpu_custom_call.1} parent=0 // pred_fallthru
    _
  // Predicated region
  $region6: #{tpu_custom_call.1} parent=0 // pred_check
    _
  $region7: #{tpu_custom_call.1} parent=0 // pred_check_branch
    %16 = sbr.rel (0) target = $region9
  $region8: #{tpu_custom_call.1} parent=0 // pred_region
    %s17 = sadd.s32 0, 0
    %p18 = scmp.lt.s32.totalorder %s17, 0
    %s19 = scalar_select %p18, %s17, 0
    %s20 = smul.addr %s19, 8
    %s21 = scalar_lea.vmem %s1, %s20
    %s22 = sadd.s32 0, 0
  $region9: #{tpu_custom_call.1} parent=0 // pred_fallthru
    _
  %s23 = sadd.s32 0, 0
  %p24 = scmp.lt.s32.totalorder %s23, 0
  %s25 = scalar_select %p24, %s23, 0
  %s26 = smul.addr %s25, 8
  %s27 = scalar_lea.vmem %s0, %s26
  %s28 = sadd.s32 0, 0
  %p29 = scmp.lt.s32.totalorder %s28, 0
  %s30 = scalar_select %p29, %s28, 0
  %s31 = smul.addr %s30, 8
  %s32 = scalar_lea.vmem %s1, %s31
  %s33 = sadd.s32 0, 0
  %p34 = scmp.lt.s32.totalorder %s33, 0
  %s35 = scalar_select %p34, %s33, 0
  %s36 = smul.addr %s35, 8
  %s37 = scalar_lea.vmem %s0, %s36
  %s38 = sadd.s32 0, 0
  %s39 = sadd.s32 0, 0
  %p40 = scmp.lt.s32.totalorder %s39, 0
  %s41 = scalar_select %p40, %s39, 0
  %s42 = smul.addr %s41, 8
  %s43 = scalar_lea.vmem %s1, %s42
  %s44 = sadd.s32 0, 0
  %p45 = scmp.eq.s32.totalorder 0, 0
  // Predicated region
  $region10: #{tpu_custom_call.1} parent=0 // pred_check
    %p46 = pneg %p45
  $region11: #{tpu_custom_call.1} parent=0 // pred_check_branch
    %48 = sbr.rel (%p46) target = $region13
  $region12: #{tpu_custom_call.1} parent=0 // pred_region
    %vm49 = vcmask 23552
    %50 = vst.msk [vmem:[#allocation2] sm:$0xff] %vm49, 0.0
    %51 = vst.msk [vmem:[#allocation2 + $0x8] sm:$0xff] %vm49, 0.0
  $region13: #{tpu_custom_call.1} parent=0 // pred_fallthru
    _
  %v52 = vld [vmem:[#allocation2] sm:$0xff]
  %v53 = vld [vmem:[#allocation2 + $0x8] sm:$0xff]
  %v54 = vld [vmem:[%s37] sm:$0xff]
  %v55 = vld [vmem:[%s37 + $0x8] sm:$0xff]
  %v56 = vld [vmem:[%s43] sm:$0xff]
  %v57 = vld [vmem:[%s43 + $0x8] sm:$0xff]
  %v58 = vsub.f32 %v54, %v56
  %v59 = vsub.f32 %v55, %v57
  %v60 = vmul.f32 %v58, %v58
  %v61 = vmul.f32 %v59, %v59
  %v62 = vadd.f32 %v52, %v60
  %v63 = vadd.f32 %v53, %v61
  %vm64 = vcmask 23552
  %65 = vst.msk [vmem:[#allocation2] sm:$0xff] %vm64, %v62
  %66 = vst.msk [vmem:[#allocation2 + $0x8] sm:$0xff] %vm64, %v63
  // Predicated region
  $region14: #{tpu_custom_call.1} parent=0 // pred_check
    %p67 = pneg %p45
  $region15: #{tpu_custom_call.1} parent=0 // pred_check_branch
    %69 = sbr.rel (%p67) target = $region17
  $region16: #{tpu_custom_call.1} parent=0 // pred_region
    %v70 = vld [vmem:[#allocation2] sm:$0xff]
    %v71 = vld [vmem:[#allocation2 + $0x8] sm:$0xff]
    %v72 = vsel %vm64, %v70, 0.0
    %73 = vadd.xlane.f32.xlu0 %v72
    %v74 = vpop.xlane.xlu0 %73
    %v75 = vsel %vm64, %v71, 0.0
    %76 = vadd.xlane.f32.xlu0 %v75
    %v77 = vpop.xlane.xlu0 %76
    %v80 = vlaneseq
    %v81 = vand.u32 %v80, 127
    %v82 = vperm.slane %v74, %v81
    %v83 = vperm.slane %v77, %v81
    %vm84 = vcmask 1041409
    %v85 = vsel %vm84, %v83, %v82
    %vm87 = vcmask 58368
    %v88 = vsel %vm87, %v85, 0.0
    %89 = vadd.xlane.f32.xlu0 %v88
    %v90 = vpop.xlane.xlu0 %89
    %vm91 = vcmask 1024
    %92 = vst.msk [vmem:[%s2] sm:$0x3] %vm91, %v90
  $region17: #{tpu_custom_call.1} parent=0 // pred_fallthru
    _
  // Predicated region
  $region18: #{tpu_custom_call.1} parent=0 // pred_check
    _
  $region19: #{tpu_custom_call.1} parent=0 // pred_check_branch
    %94 = sbr.rel (0) target = $region21
  $region20: #{tpu_custom_call.1} parent=0 // pred_region
    _
  $region21: #{tpu_custom_call.1} parent=0 // pred_fallthru
    _
  // Predicated region
  $region22: #{tpu_custom_call.1} parent=0 // pred_check
    _
  $region23: #{tpu_custom_call.1} parent=0 // pred_check_branch
    %96 = sbr.rel (0) target = $region25
  $region24: #{tpu_custom_call.1} parent=0 // pred_region
    _
  $region25: #{tpu_custom_call.1} parent=0 // pred_fallthru
    _

</llo_original>
